<compile_context>
chip_gen: v7x
topology: tpu7x:2x2x1
jax: 0.10.0
libtpu: 0.0.40
codegen_flags: <defaults>
</compile_context>

<pallas_src>
import jax
import jax.numpy as jnp
from jax.experimental import pallas as pl
from jax.experimental.pallas import tpu as pltpu


def _round_up(x, m):
    return ((x + m - 1) // m) * m


def _pick_tile(batch, block_b):
    """Batch tile: multiple of 128 (lane width), <= block_b, and chosen so the
    grid has >= 2 steps when the batch is large enough (v7x megacore)."""
    block_b = max(128, _round_up(block_b, 128))
    full = _round_up(batch, 128)
    if full <= 128:
        return 128
    if full > block_b:
        return block_b                      # grid >= 2 automatically
    half = _round_up((full + 1) // 2, 128)  # split one-block batches in two
    return min(block_b, half)


def _critic_kernel(x_ref, w1_ref, b1_ref, w2_ref, b2_ref, w3_ref, b3_ref,
                   out_ref):
    # Layer 1: h1_T = ReLU(W1 @ x_T + b1)            [50, tb]
    h1 = (jnp.dot(w1_ref[...], x_ref[...], preferred_element_type=jnp.float32)
          + b1_ref[...])
    h1 = jnp.maximum(h1, 0.0)

    # Layer 2: h2_T = ReLU(W2 @ h1_T + b2)           [40, tb]
    h2 = (jnp.dot(w2_ref[...], h1, preferred_element_type=jnp.float32)
          + b2_ref[...])
    h2 = jnp.maximum(h2, 0.0)

    # Layer 3: q_T = W3 @ h2_T + b3                  [1, tb]  (lane-dense)
    out_ref[...] = (jnp.dot(w3_ref[...], h2, preferred_element_type=jnp.float32)
                    + b3_ref[...])


def critic_forward(state, action, params, *, block_b=4096):
    """state: [B, S], action: [B, A]  ->  q: [B, 1] (float32)."""
    B, S = state.shape
    A = action.shape[1]
    F = S + A
    w1, b1, w2, b2, w3, b3 = params     # torch orientation: W [out, in], b [out]

    # Pack + transpose once in the wrapper: one HBM pass that makes every
    # kernel-side access lane-dense (the measured biggest lever).
    x_t = jnp.concatenate([state, action], axis=1).T          # [F, B]

    tb = _pick_tile(B, block_b)
    Bp = _round_up(B, tb)
    if Bp != B:
        x_t = jnp.pad(x_t, ((0, 0), (0, Bp - B)))

    grid = (Bp // tb,)

    # Column-vector biases broadcast along the lane (batch) axis in-kernel.
    b1c = b1.reshape(-1, 1)
    b2c = b2.reshape(-1, 1)
    b3c = b3.reshape(-1, 1)

    def resident(arr):
        # Full-array block, constant index -> fetched once, VMEM-resident.
        return pl.BlockSpec(arr.shape, lambda i: (0, 0))

    out = pl.pallas_call(
        _critic_kernel,
        out_shape=jax.ShapeDtypeStruct((1, Bp), jnp.float32),
        grid=grid,
        in_specs=[
            pl.BlockSpec((F, tb), lambda i: (0, i)),   # x_T, batch-tiled on lanes
            resident(w1), resident(b1c),
            resident(w2), resident(b2c),
            resident(w3), resident(b3c),
        ],
        out_specs=pl.BlockSpec((1, tb), lambda i: (0, i)),
        compiler_params=pltpu.CompilerParams(
            dimension_semantics=("parallel",)),
    )(x_t, w1, b1c, w2, b2c, w3, b3c)

    # (1, Bp) row is contiguous in batch order -> free reshape back to [B, 1].
    return out.reshape(Bp, 1)[:B]


def init_critic_params(key, state_dim, action_dim):
    """Deterministic init matching torch.nn.Linear default (U(-1/sqrt(fan_in), +)),
    stored in torch orientation: W [out, in], b [out]."""
    def linear(key, fan_in, fan_out):
        kw, kb = jax.random.split(key)
        bound = 1.0 / jnp.sqrt(fan_in)
        w = jax.random.uniform(kw, (fan_out, fan_in), jnp.float32, -bound, bound)
        b = jax.random.uniform(kb, (fan_out,), jnp.float32, -bound, bound)
        return w, b

    k1, k2, k3 = jax.random.split(key, 3)
    w1, b1 = linear(k1, state_dim + action_dim, 50)
    w2, b2 = linear(k2, 50, 40)
    w3, b3 = linear(k3, 40, 1)
    return (w1, b1, w2, b2, w3, b3)


def critic_reference(state, action, params):
    """Pure-JAX reference for correctness check (matches the torch module)."""
    w1, b1, w2, b2, w3, b3 = params
    x = jnp.concatenate([state, action], axis=1)
    x = jnp.maximum(x @ w1.T + b1, 0.0)
    x = jnp.maximum(x @ w2.T + b2, 0.0)
    return x @ w3.T + b3


if __name__ == "__main__":
    STATE_DIM, ACTION_DIM = 16, 4

    key = jax.random.PRNGKey(0)
    k_state, k_action, k_params = jax.random.split(key, 3)
    params = init_critic_params(k_params, STATE_DIM, ACTION_DIM)

    # Small-shape check (B=2): single padded 128-wide tile.
    B = 2
    state = jax.random.normal(k_state, (B, STATE_DIM), jnp.float32)
    action = jax.random.normal(k_action, (B, ACTION_DIM), jnp.float32)

    q = critic_forward(state, action, params)
    jax.block_until_ready(q)
    q_ref = critic_reference(state, action, params)
    assert q.shape == (B, 1)
    assert jnp.allclose(q, q_ref, atol=1e-5, rtol=1e-5), (q, q_ref)

    # Multi-tile + ragged-tail check (exercises grid>=2, resident weights, padding).
    B2 = 1037
    state2 = jax.random.normal(k_state, (B2, STATE_DIM), jnp.float32)
    action2 = jax.random.normal(k_action, (B2, ACTION_DIM), jnp.float32)
    q2 = critic_forward(state2, action2, params)
    jax.block_until_ready(q2)
    q2_ref = critic_reference(state2, action2, params)
    assert q2.shape == (B2, 1)
    assert jnp.allclose(q2, q2_ref, atol=1e-4, rtol=1e-4)

    print("KERNEL_OK")
</pallas_src>

<mosaic_0001>
module attributes {stable_mosaic.version = 11 : i64} {
  func.func @_critic_kernel(%arg0: i32, %arg1: memref<20x128xf32, #tpu.memory_space<vmem>>, %arg2: memref<50x20xf32, #tpu.memory_space<vmem>>, %arg3: memref<50x1xf32, #tpu.memory_space<vmem>>, %arg4: memref<40x50xf32, #tpu.memory_space<vmem>>, %arg5: memref<40x1xf32, #tpu.memory_space<vmem>>, %arg6: memref<1x40xf32, #tpu.memory_space<vmem>>, %arg7: memref<1x1xf32, #tpu.memory_space<vmem>>, %arg8: memref<1x128xf32, #tpu.memory_space<vmem>>) attributes {dimension_semantics = [#tpu.dimension_semantics<parallel>], iteration_bounds = array<i64: 1>, scalar_prefetch = 0 : i64, scratch_operands = 0 : i64, tpu.core_type = #tpu.core_type<tc>, window_params = [{transform_indices = @transform_0, window_bounds = array<i64: 20, 128>}, {pipeline_mode = #tpu.pipeline_mode<synchronous>, transform_indices = @transform_1, window_bounds = array<i64: 50, 20>}, {pipeline_mode = #tpu.pipeline_mode<synchronous>, transform_indices = @transform_2, window_bounds = array<i64: 50, 1>}, {pipeline_mode = #tpu.pipeline_mode<synchronous>, transform_indices = @transform_3, window_bounds = array<i64: 40, 50>}, {pipeline_mode = #tpu.pipeline_mode<synchronous>, transform_indices = @transform_4, window_bounds = array<i64: 40, 1>}, {pipeline_mode = #tpu.pipeline_mode<synchronous>, transform_indices = @transform_5, window_bounds = array<i64: 1, 40>}, {pipeline_mode = #tpu.pipeline_mode<synchronous>, transform_indices = @transform_6, window_bounds = array<i64: 1, 1>}, {transform_indices = @transform_7, window_bounds = array<i64: 1, 128>}]} {
    %c0 = arith.constant 0 : index
    %c0_0 = arith.constant 0 : index
    %0 = vector.load %arg2[%c0, %c0_0] : memref<50x20xf32, #tpu.memory_space<vmem>>, vector<50x20xf32>
    %c0_1 = arith.constant 0 : index
    %c0_2 = arith.constant 0 : index
    %1 = vector.load %arg1[%c0_1, %c0_2] : memref<20x128xf32, #tpu.memory_space<vmem>>, vector<20x128xf32>
    %cst = arith.constant dense<0.000000e+00> : vector<50x128xf32>
    %2 = tpu.matmul %0, %1, %cst {dimension_numbers = #tpu.dot_dimension_numbers<[1], [0], [0], [1], [0, 0, 1, 1], [], []>} : vector<50x20xf32>, vector<20x128xf32>, vector<50x128xf32> -> vector<50x128xf32>
    %c0_3 = arith.constant 0 : index
    %c0_4 = arith.constant 0 : index
    %3 = vector.load %arg3[%c0_3, %c0_4] : memref<50x1xf32, #tpu.memory_space<vmem>>, vector<50x1xf32>
    %4 = vector.broadcast %3 : vector<50x1xf32> to vector<50x128xf32>
    %5 = arith.addf %2, %4 : vector<50x128xf32>
    %cst_5 = arith.constant 0.000000e+00 : f32
    %6 = vector.broadcast %cst_5 : f32 to vector<50x128xf32>
    %7 = arith.maximumf %5, %6 : vector<50x128xf32>
    %c0_6 = arith.constant 0 : index
    %c0_7 = arith.constant 0 : index
    %8 = vector.load %arg4[%c0_6, %c0_7] : memref<40x50xf32, #tpu.memory_space<vmem>>, vector<40x50xf32>
    %cst_8 = arith.constant dense<0.000000e+00> : vector<40x128xf32>
    %9 = tpu.matmul %8, %7, %cst_8 {dimension_numbers = #tpu.dot_dimension_numbers<[1], [0], [0], [1], [0, 0, 1, 1], [], []>} : vector<40x50xf32>, vector<50x128xf32>, vector<40x128xf32> -> vector<40x128xf32>
    %c0_9 = arith.constant 0 : index
    %c0_10 = arith.constant 0 : index
    %10 = vector.load %arg5[%c0_9, %c0_10] : memref<40x1xf32, #tpu.memory_space<vmem>>, vector<40x1xf32>
    %11 = vector.broadcast %10 : vector<40x1xf32> to vector<40x128xf32>
    %12 = arith.addf %9, %11 : vector<40x128xf32>
    %cst_11 = arith.constant 0.000000e+00 : f32
    %13 = vector.broadcast %cst_11 : f32 to vector<40x128xf32>
    %14 = arith.maximumf %12, %13 : vector<40x128xf32>
    %c0_12 = arith.constant 0 : index
    %c0_13 = arith.constant 0 : index
    %15 = vector.load %arg6[%c0_12, %c0_13] : memref<1x40xf32, #tpu.memory_space<vmem>>, vector<1x40xf32>
    %cst_14 = arith.constant dense<0.000000e+00> : vector<1x128xf32>
    %16 = tpu.matmul %15, %14, %cst_14 {dimension_numbers = #tpu.dot_dimension_numbers<[1], [0], [0], [1], [0, 0, 1, 1], [], []>} : vector<1x40xf32>, vector<40x128xf32>, vector<1x128xf32> -> vector<1x128xf32>
    %c0_15 = arith.constant 0 : index
    %c0_16 = arith.constant 0 : index
    %17 = vector.load %arg7[%c0_15, %c0_16] : memref<1x1xf32, #tpu.memory_space<vmem>>, vector<1x1xf32>
    %18 = vector.broadcast %17 : vector<1x1xf32> to vector<1x128xf32>
    %19 = arith.addf %16, %18 : vector<1x128xf32>
    %c0_17 = arith.constant 0 : index
    %c0_18 = arith.constant 0 : index
    %20 = vector.load %arg8[%c0_17, %c0_18] : memref<1x128xf32, #tpu.memory_space<vmem>>, vector<1x128xf32>
    tpu.vector_store %arg8[%c0_17, %c0_18], %19 {strides = array<i32>} : memref<1x128xf32, #tpu.memory_space<vmem>>, vector<1x128xf32>,
    return
  }
  func.func @transform_0(%arg0: i32) -> (i32, i32) {
    %c0_i32 = arith.constant 0 : i32
    %c0_i32_0 = arith.constant 0 : i32
    return %c0_i32, %arg0 : i32, i32
  }
  func.func @transform_1(%arg0: i32) -> (i32, i32) {
    %c0_i32 = arith.constant 0 : i32
    %c0_i32_0 = arith.constant 0 : i32
    %c0_i32_1 = arith.constant 0 : i32
    return %c0_i32, %c0_i32_0 : i32, i32
  }
  func.func @transform_2(%arg0: i32) -> (i32, i32) {
    %c0_i32 = arith.constant 0 : i32
    %c0_i32_0 = arith.constant 0 : i32
    %c0_i32_1 = arith.constant 0 : i32
    return %c0_i32, %c0_i32_0 : i32, i32
  }
  func.func @transform_3(%arg0: i32) -> (i32, i32) {
    %c0_i32 = arith.constant 0 : i32
    %c0_i32_0 = arith.constant 0 : i32
    %c0_i32_1 = arith.constant 0 : i32
    return %c0_i32, %c0_i32_0 : i32, i32
  }
  func.func @transform_4(%arg0: i32) -> (i32, i32) {
    %c0_i32 = arith.constant 0 : i32
    %c0_i32_0 = arith.constant 0 : i32
    %c0_i32_1 = arith.constant 0 : i32
    return %c0_i32, %c0_i32_0 : i32, i32
  }
  func.func @transform_5(%arg0: i32) -> (i32, i32) {
    %c0_i32 = arith.constant 0 : i32
    %c0_i32_0 = arith.constant 0 : i32
    %c0_i32_1 = arith.constant 0 : i32
    return %c0_i32, %c0_i32_0 : i32, i32
  }
  func.func @transform_6(%arg0: i32) -> (i32, i32) {
    %c0_i32 = arith.constant 0 : i32
    %c0_i32_0 = arith.constant 0 : i32
    %c0_i32_1 = arith.constant 0 : i32
    return %c0_i32, %c0_i32_0 : i32, i32
  }
  func.func @transform_7(%arg0: i32) -> (i32, i32) {
    %c0_i32 = arith.constant 0 : i32
    %c0_i32_0 = arith.constant 0 : i32
    return %c0_i32, %arg0 : i32, i32
  }
}

</mosaic_0001>

<llo_original>
// kernel: tpu_custom_call.1
$region0: #{tpu_custom_call.1}
  #allocation0 [shape = 'u32[]', space=smem, size = 0x4, offset = 0x4, fixed_abs, tag = 'smem constant byte address 0x4 - core index']
  #allocation1 [shape = 'u32[144,128]{1,0:T(1,128)}', space=vmem, size = 0x12000, scoped, tag = 'internal scratch']
  #allocation2 [shape = 'f32[1,1]{1,0:T(1,128)S(1)}', space=vmem, size = 0x200, scoped, tag = 'scoped memory for tpu_custom_call.1']
  %s0 = inlined_call_operand.vmem [shape: f32[20,128], index: 0, kind: input, shape index: {}]
  %s1 = inlined_call_operand.vmem [shape: f32[50,20], index: 1, kind: input, shape index: {}]
  %s2 = inlined_call_operand.vmem [shape: f32[50,1], index: 2, kind: input, shape index: {}]
  %s3 = inlined_call_operand.vmem [shape: f32[40,50], index: 3, kind: input, shape index: {}]
  %s4 = inlined_call_operand.vmem [shape: f32[40,1], index: 4, kind: input, shape index: {}]
  %s5 = inlined_call_operand.vmem [shape: f32[1,40], index: 5, kind: input, shape index: {}]
  %s6 = inlined_call_operand.<no memory space> [shape: f32[1,1], index: 6, kind: input, shape index: {}]
  %s7 = inlined_call_operand.hbm [shape: f32[1,128], index: 7, kind: output, shape index: {}]
  %s8 = sld [smem:[#allocation0]]
  $region38: #{tpu_custom_call.1} parent=0
    _
  %s10 = ssub.s32 1, %s8
  %s11 = scalar_select 0, %s10, %s8
  %v12 = vstv %s6
  %13 = vst [vmem:[#allocation2] sm:$0x1] %v12
  $region1: #{tpu_custom_call.1} parent=0
    #allocation3 [shape = 'u8[512]{0}', space=vmem, size = 0x400, scoped, tag = 'output window, operand 0, single buffered']
    #allocation4 [shape = 's32[1]{0}', space=sflag, size = 0x4, scoped, tag = 'scoped memory for tpu_custom_call.1']
    %14 = vsyncpa [#allocation4], 0
    // Predicated region
    $region2: #{tpu_custom_call.1} parent=1 // pred_check
      _
    $region3: #{tpu_custom_call.1} parent=1 // pred_check_branch
      %16 = sbr.rel (0) target = $region5
    $region4: #{tpu_custom_call.1} parent=1 // pred_region
      _
    $region5: #{tpu_custom_call.1} parent=1 // pred_fallthru
      _
    // Predicated region
    $region6: #{tpu_custom_call.1} parent=1 // pred_check
      _
    $region7: #{tpu_custom_call.1} parent=1 // pred_check_branch
      %18 = sbr.rel (0) target = $region9
    $region8: #{tpu_custom_call.1} parent=1 // pred_region
      _
    $region9: #{tpu_custom_call.1} parent=1 // pred_fallthru
      _
    // Predicated region
    $region10: #{tpu_custom_call.1} parent=1 // pred_check
      _
    $region11: #{tpu_custom_call.1} parent=1 // pred_check_branch
      %20 = sbr.rel (0) target = $region13
    $region12: #{tpu_custom_call.1} parent=1 // pred_region
      _
    $region13: #{tpu_custom_call.1} parent=1 // pred_fallthru
      _
    // Predicated region
    $region14: #{tpu_custom_call.1} parent=1 // pred_check
      _
    $region15: #{tpu_custom_call.1} parent=1 // pred_check_branch
      %22 = sbr.rel (0) target = $region17
    $region16: #{tpu_custom_call.1} parent=1 // pred_region
      _
    $region17: #{tpu_custom_call.1} parent=1 // pred_fallthru
      _
    // Predicated region
    $region18: #{tpu_custom_call.1} parent=1 // pred_check
      _
    $region19: #{tpu_custom_call.1} parent=1 // pred_check_branch
      %24 = sbr.rel (0) target = $region21
    $region20: #{tpu_custom_call.1} parent=1 // pred_region
      _
    $region21: #{tpu_custom_call.1} parent=1 // pred_fallthru
      _
    // Predicated region
    $region22: #{tpu_custom_call.1} parent=1 // pred_check
      _
    $region23: #{tpu_custom_call.1} parent=1 // pred_check_branch
      %26 = sbr.rel (0) target = $region25
    $region24: #{tpu_custom_call.1} parent=1 // pred_region
      _
    $region25: #{tpu_custom_call.1} parent=1 // pred_fallthru
      _
    // Predicated region
    $region26: #{tpu_custom_call.1} parent=1 // pred_check
      _
    $region27: #{tpu_custom_call.1} parent=1 // pred_check_branch
      %28 = sbr.rel (0) target = $region29
    $region28: #{tpu_custom_call.1} parent=1 // pred_region
      _
    $region29: #{tpu_custom_call.1} parent=1 // pred_fallthru
      _
    %v29 = vld [vmem:[%s1] sm:$0xff]
    %v30 = vld [vmem:[%s1 + $0x8] sm:$0xff]
    %v31 = vld [vmem:[%s1 + $0x10] sm:$0xff]
    %v32 = vld [vmem:[%s1 + $0x18] sm:$0xff]
    %v33 = vld [vmem:[%s1 + $0x20] sm:$0xff]
    %v34 = vld [vmem:[%s1 + $0x28] sm:$0xff]
    %v35 = vld [vmem:[%s1 + $0x30] sm:$0x3]
    %v36 = vld [vmem:[%s0] sm:$0xff]
    %v37 = vld [vmem:[%s0 + $0x8] sm:$0xff]
    %v38 = vld [vmem:[%s0 + $0x10] sm:$0xf]
    %v39 = vld [vmem:[%s2] sm:$0xff]
    %v40 = vld [vmem:[%s2 + $0x8] sm:$0xff]
    %v41 = vld [vmem:[%s2 + $0x10] sm:$0xff]
    %v42 = vld [vmem:[%s2 + $0x18] sm:$0xff]
    %v43 = vld [vmem:[%s2 + $0x20] sm:$0xff]
    %v44 = vld [vmem:[%s2 + $0x28] sm:$0xff]
    %v45 = vld [vmem:[%s2 + $0x30] sm:$0x3]
    %47 = vset.pattern.permute.xlu0 0
    %48 = vperm.xlu0 %47, %v39
    %v49 = vpop.permute.xlu0 %48
    %52 = vset.pattern.permute.xlu0 0
    %53 = vperm.xlu0 %52, %v40
    %v54 = vpop.permute.xlu0 %53
    %57 = vset.pattern.permute.xlu0 0
    %58 = vperm.xlu0 %57, %v41
    %v59 = vpop.permute.xlu0 %58
    %62 = vset.pattern.permute.xlu0 0
    %63 = vperm.xlu0 %62, %v42
    %v64 = vpop.permute.xlu0 %63
    %67 = vset.pattern.permute.xlu0 0
    %68 = vperm.xlu0 %67, %v43
    %v69 = vpop.permute.xlu0 %68
    %72 = vset.pattern.permute.xlu0 0
    %73 = vperm.xlu0 %72, %v44
    %v74 = vpop.permute.xlu0 %73
    %77 = vset.pattern.permute.xlu0 0
    %78 = vperm.xlu0 %77, %v45
    %v79 = vpop.permute.xlu0 %78
    %vm81 = vcmask 162816
    %v83 = vsel %vm81, %v29, 0
    %v86 = vsel %vm81, %v30, 0
    %v89 = vsel %vm81, %v31, 0
    %v92 = vsel %vm81, %v32, 0
    %v95 = vsel %vm81, %v33, 0
    %v98 = vsel %vm81, %v34, 0
    %v101 = vsel %vm81, %v35, 0
    %vm103 = vcmask 1043456
    %v105 = vsel %vm103, %v38, 0
    %107 = vmatprep.subr.mxu0 0.0
    %108 = vmatpush1.msra.mxu0 %v36
    %109 = vmatprep.subr.mxu0 0.0
    %110 = vmatpush1.msra.mxu0 %v37
    %111 = vmatprep.subr.mxu0 0.0
    %112 = vmatpush1.msra.mxu0 %v105
    %113 = vmatprep.subr.mxu0 0.0
    %114 = vmatpush1.msra.mxu0 0.0
    %115 = vmatprep.subr.mxu0 0.0
    %116 = vmatpush1.msra.mxu0 0.0
    %117 = vmatprep.subr.mxu0 0.0
    %118 = vmatpush1.msra.mxu0 0.0
    %119 = vmatprep.subr.mxu0 0.0
    %120 = vmatpush1.msra.mxu0 0.0
    %121 = vmatprep.subr.mxu0 0.0
    %122 = vmatpush1.msra.mxu0 0.0
    %123 = vmatprep.subr.mxu0 0.0
    %124 = vmatpush1.msra.mxu0 0.0
    %125 = vmatprep.subr.mxu0 0.0
    %126 = vmatpush1.msra.mxu0 0.0
    %127 = vmatprep.subr.mxu0 0.0
    %128 = vmatpush1.msra.mxu0 0.0
    %129 = vmatprep.subr.mxu0 0.0
    %130 = vmatpush1.msra.mxu0 0.0
    %131 = vmatprep.subr.mxu0 0.0
    %132 = vmatpush1.msra.mxu0 0.0
    %133 = vmatprep.subr.mxu0 0.0
    %134 = vmatpush1.msra.mxu0 0.0
    %135 = vmatprep.subr.mxu0 0.0
    %136 = vmatpush1.msra.mxu0 0.0
    %137 = vmatprep.subr.mxu0 0.0
    %138 = vmatpush1.msra.mxu0 0.0
    %139 = vmatprep.subr.mxu0 0.0
    %140 = vmatpush1.msra.mxu0 0.0
    %141 = vmatprep.subr.mxu0 0.0
    %142 = vmatpush1.msra.mxu0 0.0
    %143 = vmatprep.subr.mxu0 0.0
    %144 = vmatpush1.msra.mxu0 0.0
    %145 = vmatprep.subr.mxu0 0.0
    %146 = vmatpush1.msra.mxu0 0.0
    %147 = vmatprep.subr.mxu0 0.0
    %148 = vmatpush1.msra.mxu0 0.0
    %149 = vmatprep.subr.mxu0 0.0
    %150 = vmatpush1.msra.mxu0 0.0
    %151 = vmatprep.subr.mxu0 0.0
    %152 = vmatpush1.msra.mxu0 0.0
    %153 = vmatprep.subr.mxu0 0.0
    %154 = vmatpush1.msra.mxu0 0.0
    %155 = vmatprep.subr.mxu0 0.0
    %156 = vmatpush1.msra.mxu0 0.0
    %157 = vmatprep.subr.mxu0 0.0
    %158 = vmatpush1.msra.mxu0 0.0
    %159 = vmatprep.subr.mxu0 0.0
    %160 = vmatpush1.msra.mxu0 0.0
    %161 = vmatprep.subr.mxu0 0.0
    %162 = vmatpush1.msra.mxu0 0.0
    %163 = vmatprep.subr.mxu0 0.0
    %164 = vmatpush1.msra.mxu0 0.0
    %165 = vmatprep.subr.mxu0 0.0
    %166 = vmatpush1.msra.mxu0 0.0
    %167 = vmatprep.subr.mxu0 0.0
    %168 = vmatpush1.msra.mxu0 0.0
    %169 = vmatprep.subr.mxu0 0.0
    %170 = vmatpush1.msra.mxu0 0.0
    %171 = vmatprep.mubr.f32.mxu0 0.0
    %172 = vmatmul.mubr.f32.gmra.mrb[0].mxu0 %v83
    %v173 = vpop.f32.mrb[0].mxu0
    %v174 = vadd.f32 %v49, %v173
    %v175 = vpop.f32.mrb[0].mxu0
    %176 = vmatprep.mubr.f32.mxu0 0.0
    %177 = vmatmul.mubr.f32.gmra.mrb[0].mxu0 %v86
    %v178 = vpop.f32.mrb[0].mxu0
    %v179 = vadd.f32 %v54, %v178
    %v180 = vpop.f32.mrb[0].mxu0
    %181 = vmatprep.mubr.f32.mxu0 0.0
    %182 = vmatmul.mubr.f32.gmra.mrb[0].mxu0 %v89
    %v183 = vpop.f32.mrb[0].mxu0
    %v184 = vadd.f32 %v59, %v183
    %v185 = vpop.f32.mrb[0].mxu0
    %186 = vmatprep.mubr.f32.mxu0 0.0
    %187 = vmatmul.mubr.f32.gmra.mrb[0].mxu0 %v92
    %v188 = vpop.f32.mrb[0].mxu0
    %v189 = vadd.f32 %v64, %v188
    %v190 = vpop.f32.mrb[0].mxu0
    %191 = vmatprep.mubr.f32.mxu0 0.0
    %192 = vmatmul.mubr.f32.gmra.mrb[0].mxu0 %v95
    %v193 = vpop.f32.mrb[0].mxu0
    %v194 = vadd.f32 %v69, %v193
    %v195 = vpop.f32.mrb[0].mxu0
    %196 = vmatprep.mubr.f32.mxu0 0.0
    %197 = vmatmul.mubr.f32.gmra.mrb[0].mxu0 %v98
    %v198 = vpop.f32.mrb[0].mxu0
    %v199 = vadd.f32 %v74, %v198
    %v200 = vpop.f32.mrb[0].mxu0
    %201 = vmatprep.mubr.f32.mxu0 0.0
    %202 = vmatmul.mubr.f32.gmra.mrb[0].mxu0 %v101
    %v203 = vpop.f32.mrb[0].mxu0
    %v204 = vadd.f32 %v79, %v203
    %v205 = vpop.f32.mrb[0].mxu0
    %206 = vdwg.mxu0
    %v207 = vmax.f32 %v174, 0.0
    %v208 = vmax.f32 %v179, 0.0
    %v209 = vmax.f32 %v184, 0.0
    %v210 = vmax.f32 %v189, 0.0
    %v211 = vmax.f32 %v194, 0.0
    %v212 = vmax.f32 %v199, 0.0
    %v213 = vmax.f32 %v204, 0.0
    %v214 = vld [vmem:[%s3] sm:$0xff]
    %v215 = vld [vmem:[%s3 + $0x8] sm:$0xff]
    %v216 = vld [vmem:[%s3 + $0x10] sm:$0xff]
    %v217 = vld [vmem:[%s3 + $0x18] sm:$0xff]
    %v218 = vld [vmem:[%s3 + $0x20] sm:$0xff]
    %v219 = vld [vmem:[%s4] sm:$0xff]
    %v220 = vld [vmem:[%s4 + $0x8] sm:$0xff]
    %v221 = vld [vmem:[%s4 + $0x10] sm:$0xff]
    %v222 = vld [vmem:[%s4 + $0x18] sm:$0xff]
    %v223 = vld [vmem:[%s4 + $0x20] sm:$0xff]
    %225 = vset.pattern.permute.xlu0 0
    %226 = vperm.xlu0 %225, %v219
    %v227 = vpop.permute.xlu0 %226
    %230 = vset.pattern.permute.xlu0 0
    %231 = vperm.xlu0 %230, %v220
    %v232 = vpop.permute.xlu0 %231
    %235 = vset.pattern.permute.xlu0 0
    %236 = vperm.xlu0 %235, %v221
    %v237 = vpop.permute.xlu0 %236
    %240 = vset.pattern.permute.xlu0 0
    %241 = vperm.xlu0 %240, %v222
    %v242 = vpop.permute.xlu0 %241
    %245 = vset.pattern.permute.xlu0 0
    %246 = vperm.xlu0 %245, %v223
    %v247 = vpop.permute.xlu0 %246
    %vm249 = vcmask 408576
    %v251 = vsel %vm249, %v214, 0
    %v254 = vsel %vm249, %v215, 0
    %v257 = vsel %vm249, %v216, 0
    %v260 = vsel %vm249, %v217, 0
    %v263 = vsel %vm249, %v218, 0
    %vm265 = vcmask 1041408
    %v267 = vsel %vm265, %v213, 0
    %269 = vmatprep.subr.mxu0 0.0
    %270 = vmatpush1.msra.mxu0 %v207
    %271 = vmatprep.subr.mxu0 0.0
    %272 = vmatpush1.msra.mxu0 %v208
    %273 = vmatprep.subr.mxu0 0.0
    %274 = vmatpush1.msra.mxu0 %v209
    %275 = vmatprep.subr.mxu0 0.0
    %276 = vmatpush1.msra.mxu0 %v210
    %277 = vmatprep.subr.mxu0 0.0
    %278 = vmatpush1.msra.mxu0 %v211
    %279 = vmatprep.subr.mxu0 0.0
    %280 = vmatpush1.msra.mxu0 %v212
    %281 = vmatprep.subr.mxu0 0.0
    %282 = vmatpush1.msra.mxu0 %v267
    %283 = vmatprep.subr.mxu0 0.0
    %284 = vmatpush1.msra.mxu0 0.0
    %285 = vmatprep.subr.mxu0 0.0
    %286 = vmatpush1.msra.mxu0 0.0
    %287 = vmatprep.subr.mxu0 0.0
    %288 = vmatpush1.msra.mxu0 0.0
    %289 = vmatprep.subr.mxu0 0.0
    %290 = vmatpush1.msra.mxu0 0.0
    %291 = vmatprep.subr.mxu0 0.0
    %292 = vmatpush1.msra.mxu0 0.0
    %293 = vmatprep.subr.mxu0 0.0
    %294 = vmatpush1.msra.mxu0 0.0
    %295 = vmatprep.subr.mxu0 0.0
    %296 = vmatpush1.msra.mxu0 0.0
    %297 = vmatprep.subr.mxu0 0.0
    %298 = vmatpush1.msra.mxu0 0.0
    %299 = vmatprep.subr.mxu0 0.0
    %300 = vmatpush1.msra.mxu0 0.0
    %301 = vmatprep.subr.mxu0 0.0
    %302 = vmatpush1.msra.mxu0 0.0
    %303 = vmatprep.subr.mxu0 0.0
    %304 = vmatpush1.msra.mxu0 0.0
    %305 = vmatprep.subr.mxu0 0.0
    %306 = vmatpush1.msra.mxu0 0.0
    %307 = vmatprep.subr.mxu0 0.0
    %308 = vmatpush1.msra.mxu0 0.0
    %309 = vmatprep.subr.mxu0 0.0
    %310 = vmatpush1.msra.mxu0 0.0
    %311 = vmatprep.subr.mxu0 0.0
    %312 = vmatpush1.msra.mxu0 0.0
    %313 = vmatprep.subr.mxu0 0.0
    %314 = vmatpush1.msra.mxu0 0.0
    %315 = vmatprep.subr.mxu0 0.0
    %316 = vmatpush1.msra.mxu0 0.0
    %317 = vmatprep.subr.mxu0 0.0
    %318 = vmatpush1.msra.mxu0 0.0
    %319 = vmatprep.subr.mxu0 0.0
    %320 = vmatpush1.msra.mxu0 0.0
    %321 = vmatprep.subr.mxu0 0.0
    %322 = vmatpush1.msra.mxu0 0.0
    %323 = vmatprep.subr.mxu0 0.0
    %324 = vmatpush1.msra.mxu0 0.0
    %325 = vmatprep.subr.mxu0 0.0
    %326 = vmatpush1.msra.mxu0 0.0
    %327 = vmatprep.subr.mxu0 0.0
    %328 = vmatpush1.msra.mxu0 0.0
    %329 = vmatprep.subr.mxu0 0.0
    %330 = vmatpush1.msra.mxu0 0.0
    %331 = vmatprep.subr.mxu0 0.0
    %332 = vmatpush1.msra.mxu0 0.0
    %333 = vmatprep.mubr.f32.mxu0 0.0
    %334 = vmatmul.mubr.f32.gmra.mrb[0].mxu0 %v251
    %v335 = vpop.f32.mrb[0].mxu0
    %v336 = vadd.f32 %v227, %v335
    %v337 = vpop.f32.mrb[0].mxu0
    %338 = vmatprep.mubr.f32.mxu0 0.0
    %339 = vmatmul.mubr.f32.gmra.mrb[0].mxu0 %v254
    %v340 = vpop.f32.mrb[0].mxu0
    %v341 = vadd.f32 %v232, %v340
    %v342 = vpop.f32.mrb[0].mxu0
    %343 = vmatprep.mubr.f32.mxu0 0.0
    %344 = vmatmul.mubr.f32.gmra.mrb[0].mxu0 %v257
    %v345 = vpop.f32.mrb[0].mxu0
    %v346 = vadd.f32 %v237, %v345
    %v347 = vpop.f32.mrb[0].mxu0
    %348 = vmatprep.mubr.f32.mxu0 0.0
    %349 = vmatmul.mubr.f32.gmra.mrb[0].mxu0 %v260
    %v350 = vpop.f32.mrb[0].mxu0
    %v351 = vadd.f32 %v242, %v350
    %v352 = vpop.f32.mrb[0].mxu0
    %353 = vmatprep.mubr.f32.mxu0 0.0
    %354 = vmatmul.mubr.f32.gmra.mrb[0].mxu0 %v263
    %v355 = vpop.f32.mrb[0].mxu0
    %v356 = vadd.f32 %v247, %v355
    %v357 = vpop.f32.mrb[0].mxu0
    %358 = vdwg.mxu0
    %v359 = vmax.f32 %v336, 0.0
    %v360 = vmax.f32 %v341, 0.0
    %v361 = vmax.f32 %v346, 0.0
    %v362 = vmax.f32 %v351, 0.0
    %v363 = vmax.f32 %v356, 0.0
    %v364 = vld [vmem:[%s5] sm:$0x1]
    %v365 = vld [vmem:[#allocation2] sm:$0x1]
    %367 = vset.pattern.permute.xlu0 0
    %368 = vperm.xlu0 %367, %v365
    %v369 = vpop.permute.xlu0 %368
    %v371 = vlaneseq
    %v372 = vshrl.u32 %v371, 7
    %v373 = vsub.s32 0, %v372
    %v374 = vrot.slane %v369, %v373
    %vm375 = vcmask 326656
    %v377 = vsel %vm375, %v364, 0
    %379 = vmatprep.subr.mxu0 0.0
    %380 = vmatpush1.msra.mxu0 %v359
    %381 = vmatprep.subr.mxu0 0.0
    %382 = vmatpush1.msra.mxu0 %v360
    %383 = vmatprep.subr.mxu0 0.0
    %384 = vmatpush1.msra.mxu0 %v361
    %385 = vmatprep.subr.mxu0 0.0
    %386 = vmatpush1.msra.mxu0 %v362
    %387 = vmatprep.subr.mxu0 0.0
    %388 = vmatpush1.msra.mxu0 %v363
    %389 = vmatprep.subr.mxu0 0.0
    %390 = vmatpush1.msra.mxu0 0.0
    %391 = vmatprep.subr.mxu0 0.0
    %392 = vmatpush1.msra.mxu0 0.0
    %393 = vmatprep.subr.mxu0 0.0
    %394 = vmatpush1.msra.mxu0 0.0
    %395 = vmatprep.subr.mxu0 0.0
    %396 = vmatpush1.msra.mxu0 0.0
    %397 = vmatprep.subr.mxu0 0.0
    %398 = vmatpush1.msra.mxu0 0.0
    %399 = vmatprep.subr.mxu0 0.0
    %400 = vmatpush1.msra.mxu0 0.0
    %401 = vmatprep.subr.mxu0 0.0
    %402 = vmatpush1.msra.mxu0 0.0
    %403 = vmatprep.subr.mxu0 0.0
    %404 = vmatpush1.msra.mxu0 0.0
    %405 = vmatprep.subr.mxu0 0.0
    %406 = vmatpush1.msra.mxu0 0.0
    %407 = vmatprep.subr.mxu0 0.0
    %408 = vmatpush1.msra.mxu0 0.0
    %409 = vmatprep.subr.mxu0 0.0
    %410 = vmatpush1.msra.mxu0 0.0
    %411 = vmatprep.subr.mxu0 0.0
    %412 = vmatpush1.msra.mxu0 0.0
    %413 = vmatprep.subr.mxu0 0.0
    %414 = vmatpush1.msra.mxu0 0.0
    %415 = vmatprep.subr.mxu0 0.0
    %416 = vmatpush1.msra.mxu0 0.0
    %417 = vmatprep.subr.mxu0 0.0
    %418 = vmatpush1.msra.mxu0 0.0
    %419 = vmatprep.subr.mxu0 0.0
    %420 = vmatpush1.msra.mxu0 0.0
    %421 = vmatprep.subr.mxu0 0.0
    %422 = vmatpush1.msra.mxu0 0.0
    %423 = vmatprep.subr.mxu0 0.0
    %424 = vmatpush1.msra.mxu0 0.0
    %425 = vmatprep.subr.mxu0 0.0
    %426 = vmatpush1.msra.mxu0 0.0
    %427 = vmatprep.subr.mxu0 0.0
    %428 = vmatpush1.msra.mxu0 0.0
    %429 = vmatprep.subr.mxu0 0.0
    %430 = vmatpush1.msra.mxu0 0.0
    %431 = vmatprep.subr.mxu0 0.0
    %432 = vmatpush1.msra.mxu0 0.0
    %433 = vmatprep.subr.mxu0 0.0
    %434 = vmatpush1.msra.mxu0 0.0
    %435 = vmatprep.subr.mxu0 0.0
    %436 = vmatpush1.msra.mxu0 0.0
    %437 = vmatprep.subr.mxu0 0.0
    %438 = vmatpush1.msra.mxu0 0.0
    %439 = vmatprep.subr.mxu0 0.0
    %440 = vmatpush1.msra.mxu0 0.0
    %441 = vmatprep.subr.mxu0 0.0
    %442 = vmatpush1.msra.mxu0 0.0
    %443 = vmatprep.mubr.f32.mxu0 0.0
    %444 = vmatmul.mubr.f32.gmra.mrb[0].mxu0 %v377
    %v445 = vpop.f32.mrb[0].mxu0
    %v446 = vadd.f32 %v374, %v445
    %v447 = vpop.f32.mrb[0].mxu0
    %448 = vdwg.mxu0
    %449 = vst [vmem:[#allocation3] sm:$0x1] %v446
    // Predicated region
    $region30: #{tpu_custom_call.1} parent=1 // pred_check
      _
    $region31: #{tpu_custom_call.1} parent=1 // pred_check_branch
      %451 = sbr.rel (0) target = $region33
    $region32: #{tpu_custom_call.1} parent=1 // pred_region
      %s453 = ssub.s32 16, 16
      %454 = vsyncadd [#allocation4], %s453
      %s456 = sshll.u32 [#allocation3], 4
      %s457 = int_to_ptr.vmem [resolvable:$true] %s456
      %459 = dma.vmem_to_hbm [thread:$0]  %s457, 16, %s7, [#allocation4]
    $region33: #{tpu_custom_call.1} parent=1 // pred_fallthru
      _
    // Predicated region
    $region34: #{tpu_custom_call.1} parent=1 // pred_check
      _
    $region35: #{tpu_custom_call.1} parent=1 // pred_check_branch
      %461 = sbr.rel (0) target = $region37
    $region36: #{tpu_custom_call.1} parent=1 // pred_region
      %462 = dma.done [#allocation4], 16
    $region37: #{tpu_custom_call.1} parent=1 // pred_fallthru
      _
    %463 = vsyncpa [#allocation4], 1

</llo_original>
